<compile_context>
chip_gen: v5e
topology: v5e:2x2
jax: 0.10.0
libtpu: 0.0.40
codegen_flags: <defaults>
</compile_context>

<pallas_src>
import math
from functools import partial

import jax
import jax.numpy as jnp
from jax.experimental import pallas as pl
from jax.experimental.pallas import tpu as pltpu


# ----------------------------------------------------------------------------
# Buffer setup (plain JAX) -- mirrors PositionalEncoding.__init__
# ----------------------------------------------------------------------------
def make_positional_encoding_table(d_model, max_len=5000, dtype=jnp.float32):
    position = jnp.arange(max_len, dtype=jnp.float32)[:, None]              # (max_len, 1)
    div_term = jnp.exp(
        jnp.arange(0, d_model, 2, dtype=jnp.float32) * (-math.log(10000.0) / d_model)
    )                                                                        # (d_model//2,)
    angles = position * div_term                                             # (max_len, d_model//2)
    pe = jnp.zeros((max_len, 1, d_model), dtype=jnp.float32)
    pe = pe.at[:, 0, 0::2].set(jnp.sin(angles))
    pe = pe.at[:, 0, 1::2].set(jnp.cos(angles))
    return pe.astype(dtype)                                                  # (max_len, 1, d_model)


# ----------------------------------------------------------------------------
# Kernels
# ----------------------------------------------------------------------------
def _drop_threshold(p):
    # drop iff bits < threshold  =>  P(keep) = 1 - p
    return jnp.uint32(min(int(round(float(p) * 4294967296.0)), 4294967295))


def _apply_dropout(y, bits, p):
    if bits.dtype != jnp.uint32:
        bits = pltpu.bitcast(bits, jnp.uint32)          # avoid signed-shift skew
    keep = bits >= _drop_threshold(p)                   # single uint compare (VPU)
    scale = jnp.float32(1.0 / (1.0 - float(p)))
    return jnp.where(keep, y * scale, jnp.zeros_like(y * scale))


def _add_kernel(x_ref, pe_ref, o_ref):
    # (tS, B, D) + (tS, 1, D) -> broadcast over batch
    o_ref[...] = (x_ref[...] + pe_ref[...]).astype(o_ref.dtype)


def _dropout_hw_prng_kernel(seed_ref, x_ref, pe_ref, o_ref, *, p):
    y = x_ref[...] + pe_ref[...]
    # Distinct PRNG stream per grid tile.
    pltpu.prng_seed(seed_ref[0] + pl.program_id(0))
    bits = pltpu.prng_random_bits(y.shape)
    o_ref[...] = _apply_dropout(y, bits, p).astype(o_ref.dtype)


def _dropout_ext_bits_kernel(x_ref, pe_ref, bits_ref, o_ref, *, p):
    y = x_ref[...] + pe_ref[...]
    o_ref[...] = _apply_dropout(y, bits_ref[...], p).astype(o_ref.dtype)


# ----------------------------------------------------------------------------
# Wrapper
# ----------------------------------------------------------------------------
def _pick_tile_rows(S, B, D, itemsize, target_bytes=2 * 1024 * 1024):
    """Largest sequence tile whose x-block stays within ~target_bytes."""
    rows = max(1, int(target_bytes) // max(1, B * D * int(itemsize)))
    rows = min(S, rows)
    if rows >= 8:
        rows = (rows // 8) * 8   # keep the leading-dim tile 8-aligned
    return int(rows)


def positional_encoding_forward(x, pe, *, p=0.1, training=True, seed=0,
                                tile_rows=None):
    """x: (seq_len, batch, d_model); pe: (max_len, 1, d_model)."""
    S, B, D = x.shape
    max_len = pe.shape[0]
    assert pe.shape == (max_len, 1, D) and S <= max_len
    pe = pe.astype(x.dtype)   # keep the kernel pure-bandwidth in x's dtype

    if tile_rows is None:
        tile_rows = _pick_tile_rows(S, B, D, jnp.dtype(x.dtype).itemsize)
    tS = int(min(tile_rows, S))
    grid = (pl.cdiv(S, tS),)

    x_spec = pl.BlockSpec((tS, B, D), lambda i: (i, 0, 0))
    pe_spec = pl.BlockSpec((tS, 1, D), lambda i: (i, 0, 0))   # rows of the full pe table
    bits_spec = pl.BlockSpec((tS, B, D), lambda i: (i, 0, 0))
    out_spec = pl.BlockSpec((tS, B, D), lambda i: (i, 0, 0))
    out_shape = jax.ShapeDtypeStruct((S, B, D), x.dtype)

    on_tpu = jax.default_backend() == "tpu"
    compiler_params = (
        pltpu.CompilerParams(dimension_semantics=("parallel",)) if on_tpu else None
    )

    apply_dropout = bool(training) and float(p) > 0.0
    if not apply_dropout:
        # Eval / p == 0: plain broadcast-add, no RNG code traced.
        return pl.pallas_call(
            _add_kernel,
            out_shape=out_shape,
            grid=grid,
            in_specs=[x_spec, pe_spec],
            out_specs=out_spec,
            compiler_params=compiler_params,
        )(x, pe)

    if on_tpu:
        # In-kernel hardware PRNG: no extra HBM traffic for the dropout mask.
        seed_arr = jnp.asarray([seed], dtype=jnp.int32)
        return pl.pallas_call(
            partial(_dropout_hw_prng_kernel, p=float(p)),
            out_shape=out_shape,
            grid=grid,
            in_specs=[
                pl.BlockSpec(memory_space=pltpu.MemorySpace.SMEM),   # seed scalar
                x_spec,
                pe_spec,
            ],
            out_specs=out_spec,
            compiler_params=compiler_params,
        )(seed_arr, x, pe)

    # Non-TPU backends (e.g. CPU interpreter) have no lowering for the TPU
    # hardware PRNG; stream externally generated bits through the same tiling.
    bits = jax.random.bits(jax.random.PRNGKey(seed), (S, B, D), dtype=jnp.uint32)
    return pl.pallas_call(
        partial(_dropout_ext_bits_kernel, p=float(p)),
        out_shape=out_shape,
        grid=grid,
        in_specs=[x_spec, pe_spec, bits_spec],
        out_specs=out_spec,
        compiler_params=compiler_params,
    )(x, pe, bits)


# ----------------------------------------------------------------------------
# Demo / self-check
# ----------------------------------------------------------------------------
if __name__ == "__main__":
    # batch=8, d_model=128 -> x blocks are exactly (8,128)-tiled (sublane- and
    # lane-dense), matching real transformer shapes.
    seq_len, batch, d_model = 16, 8, 128
    max_len = 64
    p = 0.1

    key = jax.random.PRNGKey(0)
    x = jax.random.normal(key, (seq_len, batch, d_model), dtype=jnp.float32)
    pe = make_positional_encoding_table(d_model, max_len=max_len, dtype=x.dtype)
    ref = x + pe[:seq_len]

    # Eval mode (dropout is identity): must match the pure-JAX reference.
    out_eval = positional_encoding_forward(x, pe, p=p, training=False, tile_rows=8)
    out_eval = jax.block_until_ready(out_eval)
    assert out_eval.shape == (seq_len, batch, d_model)
    assert jnp.allclose(out_eval, ref, atol=1e-6), "eval-mode mismatch"

    # Training mode: every element is either dropped (0) or (x + pe) / (1 - p).
    # tile_rows=8 -> grid of 2 steps, exercising tiling + per-tile seeding.
    out_train = positional_encoding_forward(
        x, pe, p=p, training=True, seed=42, tile_rows=8
    )
    out_train = jax.block_until_ready(out_train)
    assert out_train.shape == (seq_len, batch, d_model)
    scale = 1.0 / (1.0 - p)
    kept_ok = jnp.isclose(out_train, ref * scale, rtol=1e-5, atol=1e-6)
    dropped = out_train == 0.0
    assert bool(jnp.all(kept_ok | dropped)), "training-mode dropout mismatch"
    frac_dropped = float(jnp.mean(dropped.astype(jnp.float32)))
    assert 0.0 < frac_dropped < 0.5, f"implausible drop fraction {frac_dropped}"

    print("KERNEL_OK")
</pallas_src>

<mosaic_0001>
module attributes {stable_mosaic.version = 11 : i64} {
  func.func @_add_kernel(%arg0: i32, %arg1: memref<8x8x128xf32, #tpu.memory_space<vmem>>, %arg2: memref<8x1x128xf32, #tpu.memory_space<vmem>>, %arg3: memref<8x8x128xf32, #tpu.memory_space<vmem>>) attributes {dimension_semantics = [#tpu.dimension_semantics<arbitrary>], iteration_bounds = array<i64: 2>, scalar_prefetch = 0 : i64, scratch_operands = 0 : i64, tpu.core_type = #tpu.core_type<tc>, window_params = [{transform_indices = @transform_0, window_bounds = array<i64: 8, 8, 128>}, {transform_indices = @transform_1, window_bounds = array<i64: 8, 1, 128>}, {transform_indices = @transform_2, window_bounds = array<i64: 8, 8, 128>}]} {
    %c0 = arith.constant 0 : index
    %c0_0 = arith.constant 0 : index
    %c0_1 = arith.constant 0 : index
    %0 = vector.load %arg1[%c0, %c0_0, %c0_1] : memref<8x8x128xf32, #tpu.memory_space<vmem>>, vector<8x8x128xf32>
    %c0_2 = arith.constant 0 : index
    %c0_3 = arith.constant 0 : index
    %c0_4 = arith.constant 0 : index
    %1 = vector.load %arg2[%c0_2, %c0_3, %c0_4] : memref<8x1x128xf32, #tpu.memory_space<vmem>>, vector<8x1x128xf32>
    %2 = vector.broadcast %1 : vector<8x1x128xf32> to vector<8x8x128xf32>
    %3 = arith.addf %0, %2 : vector<8x8x128xf32>
    %c0_5 = arith.constant 0 : index
    %c0_6 = arith.constant 0 : index
    %c0_7 = arith.constant 0 : index
    %4 = vector.load %arg3[%c0_5, %c0_6, %c0_7] : memref<8x8x128xf32, #tpu.memory_space<vmem>>, vector<8x8x128xf32>
    tpu.vector_store %arg3[%c0_5, %c0_6, %c0_7], %3 {strides = array<i32>} : memref<8x8x128xf32, #tpu.memory_space<vmem>>, vector<8x8x128xf32>,
    return
  }
  func.func @transform_0(%arg0: i32) -> (i32, i32, i32) {
    %c0_i32 = arith.constant 0 : i32
    %c0_i32_0 = arith.constant 0 : i32
    %c0_i32_1 = arith.constant 0 : i32
    return %arg0, %c0_i32, %c0_i32_0 : i32, i32, i32
  }
  func.func @transform_1(%arg0: i32) -> (i32, i32, i32) {
    %c0_i32 = arith.constant 0 : i32
    %c0_i32_0 = arith.constant 0 : i32
    %c0_i32_1 = arith.constant 0 : i32
    return %arg0, %c0_i32, %c0_i32_0 : i32, i32, i32
  }
  func.func @transform_2(%arg0: i32) -> (i32, i32, i32) {
    %c0_i32 = arith.constant 0 : i32
    %c0_i32_0 = arith.constant 0 : i32
    %c0_i32_1 = arith.constant 0 : i32
    return %arg0, %c0_i32, %c0_i32_0 : i32, i32, i32
  }
}

</mosaic_0001>

<llo_original>
// kernel: tpu_custom_call.1
$region0: #{tpu_custom_call.1}
  #allocation0 [shape = 'u32[]', space=smem, size = 0x4, offset = 0x4, fixed_abs, tag = 'smem constant byte address 0x4 - core index']
  #allocation1 [shape = 'u32[72,128]{1,0:T(1,128)}', space=vmem, size = 0x9000, scoped, tag = 'internal scratch']
  %s0 = inlined_call_operand.hbm [shape: f32[16,8,128], index: 0, kind: input, shape index: {}]
  %s1 = inlined_call_operand.hbm [shape: f32[64,1,128], index: 1, kind: input, shape index: {}]
  %s2 = inlined_call_operand.hbm [shape: f32[16,8,128], index: 2, kind: output, shape index: {}]
  %s3 = sld [smem:[#allocation0]]
  $region49: #{tpu_custom_call.1} parent=0
    _
  %s5 = ssub.s32 1, %s3
  %s6 = scalar_select 0, %s5, %s3
  $region1: #{tpu_custom_call.1} parent=0
    #allocation2 [shape = 'u8[65536]{0}', space=vmem, size = 0x10000, scoped, tag = 'input window, operand 0']
    #allocation3 [shape = 's32[2]{0}', space=sflag, size = 0x8, scoped, tag = 'scoped memory for tpu_custom_call.1']
    #allocation4 [shape = 's32[2]{0}', space=sflag, size = 0x8, scoped, tag = 'scoped memory for tpu_custom_call.1']
    #allocation5 [shape = 'u8[8192]{0}', space=vmem, size = 0x2000, scoped, tag = 'input window, operand 1']
    #allocation6 [shape = 's32[2]{0}', space=sflag, size = 0x8, scoped, tag = 'scoped memory for tpu_custom_call.1']
    #allocation7 [shape = 'u8[65536]{0}', space=vmem, size = 0x10000, scoped, tag = 'output window, operand 0']
    %7 = vsyncpa [#allocation3], 0
    %s8 = scalar_lea.sflag [#allocation3], 1
    %9 = vsyncpa %s8, 0
    %10 = vsyncpa [#allocation6], 0
    %s11 = scalar_lea.sflag [#allocation6], 1
    %12 = vsyncpa %s11, 0
    %13 = vsyncpa [#allocation4], 0
    %s14 = scalar_lea.sflag [#allocation4], 1
    %15 = vsyncpa %s14, 0
    loop: start=0, step=1, limit=4
    $region2: #{tpu_custom_call.1} parent=1 // loop_pre_header
      _
    $region3: #{tpu_custom_call.1} parent=1 // loop_header
      %s17 = sphi 0, %s21
      %p18 = scmp.ge.s32.totalorder %s17, 4
      %s27 = sphi 0, %s29
      %s30 = sphi 0, %s27
      %s31 = sphi 0, %s30
      %s47 = sphi 0, %s31
      %s53 = sphi 0, %s55
      %s56 = sphi 0, %s53
      %s57 = sphi 0, %s56
      %s73 = sphi 0, %s57
      %s79 = sphi 0, %s81
      %s82 = sphi 0, %s79
      %s83 = sphi 0, %s82
      %s99 = sphi 0, %s83
    $region4: #{tpu_custom_call.1} parent=1 // loop_header_branch
      %20 = sbr.rel (%p18) target = $region8
    $region5: #{tpu_custom_call.1} parent=1 // loop_body
      %s22 = ssub.s32 %s17, 1
      %s23 = ssub.s32 %s17, 2
      %s24 = sadd.s32 %s17, 1
      %s25 = ssub.s32 %s17, %s24
      %p26 = scmp.eq.s32.totalorder %s25, 0
      %s28 = sadd.s32 %s27, 1
      %s29 = scalar_select %p26, %s27, %s28
      %p32 = pneg %p26
      %p33 = scmp.eq.s32.totalorder %s17, 1
      %p34 = por %p32, %p33
      %p35 = scmp.ne.s32.totalorder %s27, %s30
      %p36 = scmp.eq.s32.totalorder %s17, 0
      %p37 = por %p35, %p36
      %p38 = scmp.ne.s32.totalorder %s27, %s30
      %p39 = scmp.eq.s32.totalorder %s22, 1
      %p40 = por %p38, %p39
      %p41 = scmp.ne.s32.totalorder %s30, %s31
      %p42 = scmp.eq.s32.totalorder %s22, 0
      %p43 = por %p41, %p42
      %p44 = scmp.ne.s32.totalorder %s30, %s31
      %p45 = scmp.eq.s32.totalorder %s23, 1
      %p46 = por %p44, %p45
      %p48 = scmp.ne.s32.totalorder %s31, %s47
      %p49 = scmp.eq.s32.totalorder %s23, 0
      %p50 = por %p48, %p49
      %s51 = ssub.s32 %s17, %s24
      %p52 = scmp.eq.s32.totalorder %s51, 0
      %s54 = sadd.s32 %s53, 1
      %s55 = scalar_select %p52, %s53, %s54
      %p58 = pneg %p52
      %p59 = scmp.eq.s32.totalorder %s17, 1
      %p60 = por %p58, %p59
      %p61 = scmp.ne.s32.totalorder %s53, %s56
      %p62 = scmp.eq.s32.totalorder %s17, 0
      %p63 = por %p61, %p62
      %p64 = scmp.ne.s32.totalorder %s53, %s56
      %p65 = scmp.eq.s32.totalorder %s22, 1
      %p66 = por %p64, %p65
      %p67 = scmp.ne.s32.totalorder %s56, %s57
      %p68 = scmp.eq.s32.totalorder %s22, 0
      %p69 = por %p67, %p68
      %p70 = scmp.ne.s32.totalorder %s56, %s57
      %p71 = scmp.eq.s32.totalorder %s23, 1
      %p72 = por %p70, %p71
      %p74 = scmp.ne.s32.totalorder %s57, %s73
      %p75 = scmp.eq.s32.totalorder %s23, 0
      %p76 = por %p74, %p75
      %s77 = ssub.s32 %s17, %s24
      %p78 = scmp.eq.s32.totalorder %s77, 0
      %s80 = sadd.s32 %s79, 1
      %s81 = scalar_select %p78, %s79, %s80
      %p84 = pneg %p78
      %p85 = scmp.eq.s32.totalorder %s17, 1
      %p86 = por %p84, %p85
      %p87 = scmp.ne.s32.totalorder %s79, %s82
      %p88 = scmp.eq.s32.totalorder %s17, 0
      %p89 = por %p87, %p88
      %p90 = scmp.ne.s32.totalorder %s79, %s82
      %p91 = scmp.eq.s32.totalorder %s22, 1
      %p92 = por %p90, %p91
      %p93 = scmp.ne.s32.totalorder %s82, %s83
      %p94 = scmp.eq.s32.totalorder %s22, 0
      %p95 = por %p93, %p94
      %p96 = scmp.ne.s32.totalorder %s82, %s83
      %p97 = scmp.eq.s32.totalorder %s23, 1
      %p98 = por %p96, %p97
      %p100 = scmp.ne.s32.totalorder %s83, %s99
      %p101 = scmp.eq.s32.totalorder %s23, 0
      %p102 = por %p100, %p101
      %p103 = scmp.le.s32.totalorder 1, %s17
      %p104 = scmp.lt.s32.totalorder %s17, 3
      %p105 = pnand %p103, %p104
      %p106 = pneg %p105
      // Predicated region
      $region9: #{tpu_custom_call.1} parent=5 // pred_check
        _
      $region10: #{tpu_custom_call.1} parent=5 // pred_check_branch
        %108 = sbr.rel (%p105) target = $region12
      $region11: #{tpu_custom_call.1} parent=5 // pred_region
        %s109 = ssub.s32 %s17, 1
      $region12: #{tpu_custom_call.1} parent=5 // pred_fallthru
        _
      %p110 = scmp.lt.s32.totalorder %s17, 2
      // Predicated region
      $region13: #{tpu_custom_call.1} parent=5 // pred_check
        %p111 = pneg %p110
      $region14: #{tpu_custom_call.1} parent=5 // pred_check_branch
        %113 = sbr.rel (%p111) target = $region16
      $region15: #{tpu_custom_call.1} parent=5 // pred_region
        // Predicated region
        $region17: #{tpu_custom_call.1} parent=15 // pred_check
          %p114 = pneg %p37
        $region18: #{tpu_custom_call.1} parent=15 // pred_check_branch
          %116 = sbr.rel (%p114) target = $region20
        $region19: #{tpu_custom_call.1} parent=15 // pred_region
          %s117 = sand.u32 %s27, 1
          %s118 = scalar_lea.sflag [#allocation3], %s117
          %s119 = sand.u32 %s27, 1
          %s120 = smul.addr %s119, 64
          %s121 = scalar_lea.vmem [#allocation2], %s120
          %s122 = smul.u32 8, %s17
          %124 = vsyncadd %s118, 0
          %s125 = smul.addr %s122, 8
          %s126 = scalar_lea.hbm %s0, %s125
          %s127 = sshll.u32 %s126, 4
          %s128 = int_to_ptr.hbm [resolvable:$true] %s127
          %s129 = sshll.u32 %s121, 4
          %s130 = int_to_ptr.vmem [resolvable:$true] %s129
          %135 = dma.hbm_to_vmem [thread:$0]  %s128, 1024, %s130, %s118, 128, 128, 8
        $region20: #{tpu_custom_call.1} parent=15 // pred_fallthru
          _
        // Predicated region
        $region21: #{tpu_custom_call.1} parent=15 // pred_check
          %p136 = pneg %p63
        $region22: #{tpu_custom_call.1} parent=15 // pred_check_branch
          %138 = sbr.rel (%p136) target = $region24
        $region23: #{tpu_custom_call.1} parent=15 // pred_region
          %s139 = sand.u32 %s53, 1
          %s140 = scalar_lea.sflag [#allocation6], %s139
          %s141 = sand.u32 %s53, 1
          %s142 = smul.addr %s141, 8
          %s143 = scalar_lea.vmem [#allocation5], %s142
          %s144 = smul.u32 8, %s17
          %146 = vsyncadd %s140, 0
          %s147 = scalar_lea.hbm %s1, %s144
          %s148 = sshll.u32 %s147, 4
          %s149 = int_to_ptr.hbm [resolvable:$true] %s148
          %s150 = sshll.u32 %s143, 4
          %s151 = int_to_ptr.vmem [resolvable:$true] %s150
          %156 = dma.hbm_to_vmem [thread:$0]  %s149, 128, %s151, %s140, 16, 16, 1
        $region24: #{tpu_custom_call.1} parent=15 // pred_fallthru
          _
      $region16: #{tpu_custom_call.1} parent=5 // pred_fallthru
        _
      %p157 = scmp.le.s32.totalorder 1, %s17
      %p158 = scmp.lt.s32.totalorder %s17, 3
      %p159 = pnand %p157, %p158
      %p160 = pneg %p159
      // Predicated region
      $region25: #{tpu_custom_call.1} parent=5 // pred_check
        _
      $region26: #{tpu_custom_call.1} parent=5 // pred_check_branch
        %162 = sbr.rel (%p159) target = $region28
      $region27: #{tpu_custom_call.1} parent=5 // pred_region
        %s163 = ssub.s32 %s17, 1
        %s164 = sand.u32 %s30, 1
        %s165 = scalar_lea.sflag [#allocation3], %s164
        %s166 = sand.u32 %s30, 1
        %s167 = smul.addr %s166, 64
        %s168 = scalar_lea.vmem [#allocation2], %s167
        // Predicated region
        $region29: #{tpu_custom_call.1} parent=27 // pred_check
          %p169 = pneg %p43
        $region30: #{tpu_custom_call.1} parent=27 // pred_check_branch
          %171 = sbr.rel (%p169) target = $region32
        $region31: #{tpu_custom_call.1} parent=27 // pred_region
          %173 = dma.done %s165, 1024
        $region32: #{tpu_custom_call.1} parent=27 // pred_fallthru
          _
        %s174 = sand.u32 %s56, 1
        %s175 = scalar_lea.sflag [#allocation6], %s174
        %s176 = sand.u32 %s56, 1
        %s177 = smul.addr %s176, 8
        %s178 = scalar_lea.vmem [#allocation5], %s177
        // Predicated region
        $region33: #{tpu_custom_call.1} parent=27 // pred_check
          %p179 = pneg %p69
        $region34: #{tpu_custom_call.1} parent=27 // pred_check_branch
          %181 = sbr.rel (%p179) target = $region36
        $region35: #{tpu_custom_call.1} parent=27 // pred_region
          %183 = dma.done %s175, 128
        $region36: #{tpu_custom_call.1} parent=27 // pred_fallthru
          _
        %s184 = sand.u32 %s30, 1
        %s185 = scalar_lea.sflag [#allocation3], %s184
        %s186 = sand.u32 %s30, 1
        %s187 = smul.addr %s186, 64
        %s188 = scalar_lea.vmem [#allocation2], %s187
        %p189 = pneg %p43
        %p190 = pneg %p40
        %s191 = sand.u32 %s56, 1
        %s192 = scalar_lea.sflag [#allocation6], %s191
        %s193 = sand.u32 %s56, 1
        %s194 = smul.addr %s193, 8
        %s195 = scalar_lea.vmem [#allocation5], %s194
        %p196 = pneg %p69
        %p197 = pneg %p66
        %p198 = pneg %p95
        %p199 = pneg %p92
        %s200 = sand.u32 %s82, 1
        %s201 = scalar_lea.sflag [#allocation4], %s200
        %s202 = sand.u32 %s82, 1
        %s203 = smul.addr %s202, 64
        %s204 = scalar_lea.vmem [#allocation7], %s203
        %s205 = smul.u32 8, %s22
        %s206 = smul.u32 8, %s22
        %s207 = smul.u32 8, %s22
        %v208 = vld [vmem:[%s168] sm:$0xff]
        %v209 = vld [vmem:[%s168 + $0x8] sm:$0xff]
        %v210 = vld [vmem:[%s168 + $0x10] sm:$0xff]
        %v211 = vld [vmem:[%s168 + $0x18] sm:$0xff]
        %v212 = vld [vmem:[%s168 + $0x20] sm:$0xff]
        %v213 = vld [vmem:[%s168 + $0x28] sm:$0xff]
        %v214 = vld [vmem:[%s168 + $0x30] sm:$0xff]
        %v215 = vld [vmem:[%s168 + $0x38] sm:$0xff]
        %v216 = vld [vmem:[%s178] sm:$0x1]
        %v217 = vld [vmem:[%s178 + $0x1] sm:$0x1]
        %v218 = vld [vmem:[%s178 + $0x2] sm:$0x1]
        %v219 = vld [vmem:[%s178 + $0x3] sm:$0x1]
        %v220 = vld [vmem:[%s178 + $0x4] sm:$0x1]
        %v221 = vld [vmem:[%s178 + $0x5] sm:$0x1]
        %v222 = vld [vmem:[%s178 + $0x6] sm:$0x1]
        %v223 = vld [vmem:[%s178 + $0x7] sm:$0x1]
        %v232 = vperm.slane %v216, 0
        %v233 = vperm.slane %v217, 0
        %v234 = vperm.slane %v218, 0
        %v235 = vperm.slane %v219, 0
        %v236 = vperm.slane %v220, 0
        %v237 = vperm.slane %v221, 0
        %v238 = vperm.slane %v222, 0
        %v239 = vperm.slane %v223, 0
        %v248 = vadd.f32 %v208, %v232
        %v249 = vadd.f32 %v209, %v233
        %v250 = vadd.f32 %v210, %v234
        %v251 = vadd.f32 %v211, %v235
        %v252 = vadd.f32 %v212, %v236
        %v253 = vadd.f32 %v213, %v237
        %v254 = vadd.f32 %v214, %v238
        %v255 = vadd.f32 %v215, %v239
        %256 = vst [vmem:[%s204] sm:$0xff] %v248
        %257 = vst [vmem:[%s204 + $0x8] sm:$0xff] %v249
        %258 = vst [vmem:[%s204 + $0x10] sm:$0xff] %v250
        %259 = vst [vmem:[%s204 + $0x18] sm:$0xff] %v251
        %260 = vst [vmem:[%s204 + $0x20] sm:$0xff] %v252
        %261 = vst [vmem:[%s204 + $0x28] sm:$0xff] %v253
        %262 = vst [vmem:[%s204 + $0x30] sm:$0xff] %v254
        %263 = vst [vmem:[%s204 + $0x38] sm:$0xff] %v255
        %s264 = sand.u32 %s82, 1
        %s265 = scalar_lea.sflag [#allocation4], %s264
        %s266 = sand.u32 %s82, 1
        %s267 = smul.addr %s266, 64
        %s268 = scalar_lea.vmem [#allocation7], %s267
        // Predicated region
        $region37: #{tpu_custom_call.1} parent=27 // pred_check
          %p269 = pneg %p92
        $region38: #{tpu_custom_call.1} parent=27 // pred_check_branch
          %271 = sbr.rel (%p269) target = $region40
        $region39: #{tpu_custom_call.1} parent=27 // pred_region
          %s272 = smul.u32 8, %s22
          %274 = vsyncadd %s265, 0
          %s275 = smul.addr %s272, 8
          %s276 = scalar_lea.hbm %s2, %s275
          %s277 = sshll.u32 %s268, 4
          %s278 = int_to_ptr.vmem [resolvable:$true] %s277
          %s279 = sshll.u32 %s276, 4
          %s280 = int_to_ptr.hbm [resolvable:$true] %s279
          %285 = dma.vmem_to_hbm [thread:$0]  %s278, 1024, %s280, %s265, 128, 128, 8
        $region40: #{tpu_custom_call.1} parent=27 // pred_fallthru
          _
      $region28: #{tpu_custom_call.1} parent=5 // pred_fallthru
        _
      %p286 = scmp.le.s32.totalorder 2, %s17
      // Predicated region
      $region41: #{tpu_custom_call.1} parent=5 // pred_check
        %p287 = pneg %p286
      $region42: #{tpu_custom_call.1} parent=5 // pred_check_branch
        %289 = sbr.rel (%p287) target = $region44
      $region43: #{tpu_custom_call.1} parent=5 // pred_region
        %s290 = ssub.s32 %s17, 2
        // Predicated region
        $region45: #{tpu_custom_call.1} parent=43 // pred_check
          %p291 = pneg %p98
        $region46: #{tpu_custom_call.1} parent=43 // pred_check_branch
          %293 = sbr.rel (%p291) target = $region48
        $region47: #{tpu_custom_call.1} parent=43 // pred_region
          %s294 = sand.u32 %s83, 1
          %s295 = scalar_lea.sflag [#allocation4], %s294
          %s296 = sand.u32 %s83, 1
          %s297 = smul.addr %s296, 64
          %s298 = scalar_lea.vmem [#allocation7], %s297
          %300 = dma.done %s295, 1024
        $region48: #{tpu_custom_call.1} parent=43 // pred_fallthru
          _
      $region44: #{tpu_custom_call.1} parent=5 // pred_fallthru
        _
    $region6: #{tpu_custom_call.1} parent=1 // loop_footer
      %s21 = sadd.s32 1, %s17
    $region7: #{tpu_custom_call.1} parent=1 // loop_footer_branch
      %16 = sbr.rel target = $region3
    $region8: #{tpu_custom_call.1} parent=1 // loop_exit
      _
    %301 = vsyncpa [#allocation3], 1
    %s302 = scalar_lea.sflag [#allocation3], 1
    %303 = vsyncpa %s302, 1
    %304 = vsyncpa [#allocation6], 1
    %s305 = scalar_lea.sflag [#allocation6], 1
    %306 = vsyncpa %s305, 1
    %307 = vsyncpa [#allocation4], 1
    %s308 = scalar_lea.sflag [#allocation4], 1
    %309 = vsyncpa %s308, 1

</llo_original>
